<compile_context>
chip_gen: v7x
topology: tpu7x:2x2x1
jax: 0.10.0
libtpu: 0.0.40
codegen_flags: <defaults>
</compile_context>

<pallas_src>
import functools

import jax
import jax.numpy as jnp
from jax.experimental import pallas as pl
from jax.experimental.pallas import tpu as pltpu


def _round_up(v, m):
    return ((v + m - 1) // m) * m


def _cdiv(a, b):
    return (a + b - 1) // b


def _rbf_fwd_kernel(xpa_ref, xa_ref, w_ref, o_ref, *, tn, w_resident):
    """One (i, j) grid step: o[i] += phi(Xp_i, X_j) @ W_j.

    xpa_ref: (TM, D+2) augmented queries  [xp, ||xp||^2, 1]
    xa_ref : (TN, D+2) augmented refs     [-2*eps^2*x, eps^2, eps^2*||x||^2+1]
    so that  xpa @ xa^T == eps^2 * d^2 + 1  elementwise.
    """
    j = pl.program_id(1)

    @pl.when(j == 0)
    def _init():
        o_ref[...] = jnp.zeros_like(o_ref)

    # arg = eps^2 * d^2 + 1, computed entirely on the MXU (f32 accumulation).
    arg = jax.lax.dot_general(
        xpa_ref[...], xa_ref[...], (((1,), (1,)), ((), ())),
        preferred_element_type=jnp.float32)                       # (TM, TN)

    # multiquadric(eps * d) = sqrt(eps^2 d^2 + 1); the clamp guards the
    # Gram-identity cancellation (arg >= 1 mathematically).
    phi = jnp.sqrt(jnp.maximum(arg, 1.0))

    if w_resident:
        # W is fully VMEM-resident; slice the rows for this N-tile.
        start = pl.multiple_of(j * tn, tn)
        w = w_ref[pl.ds(start, tn), :]                            # (TN, Kp)
    else:
        w = w_ref[...]                                            # (TN, Kp)

    # W is pre-cast in the wrapper (bf16 on the fast path); match its dtype so
    # phi @ W runs single-pass on the MXU.  Accumulation stays f32 in o_ref.
    phi = phi.astype(w.dtype)
    o_ref[...] += jnp.dot(phi, w, preferred_element_type=jnp.float32)


def rbf_forward(xp, x, eps, w, *, tm=512, tn=1024, use_bf16_mxu=True,
                w_resident_bytes=4 * 1024 * 1024,
                vmem_limit_bytes=48 * 1024 * 1024):
    """Pallas RBF.forward (multiquadric).

    xp: (M, D), x: (N, D), eps: scalar or (N,), w: (N, K) == Solve.M^T.
    Returns (M, K) float32.

    TM is a multiple of 8 (sublanes), TN / Kpad are multiples of 128 (lanes).
    Defaults (512, 1024) fit comfortably within the 48 MiB VMEM budget on
    v5e/v6e/v7x.
    """
    xp = jnp.asarray(xp, jnp.float32)
    x = jnp.asarray(x, jnp.float32)
    w = jnp.asarray(w, jnp.float32)
    M, D = xp.shape
    N, Dx = x.shape
    assert Dx == D, (xp.shape, x.shape)
    Nw, K = w.shape
    assert Nw == N, (x.shape, w.shape)

    eps = jnp.broadcast_to(jnp.asarray(eps, jnp.float32).reshape(-1), (N,))
    eps2 = eps * eps                                              # (N,)

    # ---- tile sizes: clamp for tiny problems and (8, 128) layout rules ----
    tm = _round_up(max(8, min(tm, _round_up(M, 8))), 8)
    # Give the 'parallel' M axis at least 2 tiles so both v7x TensorCores
    # get work (negligible overhead on single-TC chips).
    tm = max(8, min(tm, _round_up(_cdiv(M, 2), 8)))
    tn = _round_up(max(128, min(tn, _round_up(N, 128))), 128)
    Mp = _round_up(M, tm)
    Np = _round_up(N, tn)
    Kp = _round_up(K, 128)   # lane-dense output / MXU tiles
    Da = D + 2

    # ---- augmented operands: hoists ||xp||^2, ||x||^2 and the eps^2 folding
    # out of the kernel; the whole eps^2*d^2 + 1 map becomes one matmul ----
    xp_sq = jnp.sum(xp * xp, axis=-1, keepdims=True)              # (M, 1)
    xp_aug = jnp.concatenate(
        [xp, xp_sq, jnp.ones((M, 1), jnp.float32)], axis=-1)      # (M, D+2)

    x_sq = jnp.sum(x * x, axis=-1)                                # (N,)
    x_aug = jnp.concatenate(
        [x * (-2.0 * eps2)[:, None],
         eps2[:, None],
         (eps2 * x_sq + 1.0)[:, None]], axis=-1)                  # (N, D+2)

    # Zero padding keeps semantics exact: padded reference rows give arg == 0
    # -> phi == 1, but hit zero rows of W; padded query rows are sliced off.
    xp_aug = jnp.pad(xp_aug, ((0, Mp - M), (0, 0)))
    x_aug = jnp.pad(x_aug, ((0, Np - N), (0, 0)))
    w_dtype = jnp.bfloat16 if use_bf16_mxu else jnp.float32
    w_p = jnp.pad(w, ((0, Np - N), (0, Kp - K))).astype(w_dtype)

    # Keep W fully VMEM-resident when small -> DMA'd once, not per grid step.
    # (4 MiB threshold keeps the worst-case double-buffered footprint modest
    # on v7x's 64 MiB VMEM.)
    w_bytes = Np * Kp * jnp.dtype(w_dtype).itemsize
    w_resident = w_bytes <= w_resident_bytes
    if w_resident:
        w_spec = pl.BlockSpec((Np, Kp), lambda i, j: (0, 0))
    else:
        w_spec = pl.BlockSpec((tn, Kp), lambda i, j: (j, 0))

    kernel = functools.partial(_rbf_fwd_kernel, tn=tn, w_resident=w_resident)

    cp_kwargs = dict(dimension_semantics=("parallel", "arbitrary"))
    if vmem_limit_bytes is not None:
        cp_kwargs["vmem_limit_bytes"] = vmem_limit_bytes

    out_p = pl.pallas_call(
        kernel,
        out_shape=jax.ShapeDtypeStruct((Mp, Kp), jnp.float32),
        grid=(Mp // tm, Np // tn),
        in_specs=[
            pl.BlockSpec((tm, Da), lambda i, j: (i, 0)),   # augmented Xp tile
            pl.BlockSpec((tn, Da), lambda i, j: (j, 0)),   # augmented X tile
            w_spec,                                        # coefficients W
        ],
        out_specs=pl.BlockSpec((tm, Kp), lambda i, j: (i, 0)),
        compiler_params=pltpu.CompilerParams(**cp_kwargs),
    )(xp_aug, x_aug, w_p)

    return out_p[:M, :K]


# ----- plain-JAX glue mirroring RBF.fit / Solve.fit (parameter setup) --------
# TODO(synk): only the 'multiquadric' kernel (module default) is fused into
# the Pallas forward; other entries of KERNELS would need their own phi map.
def _cdist(a, b):
    d2 = jnp.sum((a[:, None, :] - b[None, :, :]) ** 2, axis=-1)
    return jnp.sqrt(jnp.maximum(d2, 0.0))


def _multiquadric(x):
    return jnp.sqrt(x * x + 1.0)


def rbf_fit(X, Y, smooth=1e-8):
    """Returns (eps (N,), W (N, K)) with W == Solve.M^T of the torch module."""
    N = X.shape[0]
    dist = _cdist(X, X)                                   # (N, N)
    eps = jnp.ones((N,), jnp.float32) / jnp.mean(dist)    # ones(len(dist))/dist.mean()
    phi = _multiquadric(eps[None, :] * dist)              # kernel(eps * dist)
    l = -smooth                                           # Solve(l=-smooth)
    A = phi.T + l * jnp.eye(N, dtype=jnp.float32)         # X^T + eye * l
    W = jnp.linalg.solve(A, Y)                            # == lu_solve(Y, ...) == M^T
    return eps, W


if __name__ == "__main__":
    key = jax.random.PRNGKey(0)
    k1, k2, k3, k4, k5, k6, k7 = jax.random.split(key, 7)

    # --- test 1: exact f32 path against the module's fit/forward flow ---
    N, M, D, K = 8, 16, 4, 3
    X = jax.random.normal(k1, (N, D), dtype=jnp.float32)    # fit inputs
    Y = jax.random.normal(k2, (N, K), dtype=jnp.float32)    # fit targets
    Xp = jax.random.normal(k3, (M, D), dtype=jnp.float32)   # query points

    eps, W = rbf_fit(X, Y, smooth=1e-8)
    out = jax.block_until_ready(rbf_forward(Xp, X, eps, W, use_bf16_mxu=False))
    ref = _multiquadric(eps[None, :] * _cdist(Xp, X)) @ W
    assert out.shape == (M, K)
    assert jnp.allclose(out, ref, atol=1e-4, rtol=1e-4), (out, ref)

    # --- test 2: default (bf16 MXU feed) path; exercises the tiled grid
    #     (M and N span multiple tiles, reduction over j, M/N/K padding) ---
    M2, N2, D2, K2 = 300, 200, 16, 5
    Xp2 = jax.random.normal(k4, (M2, D2), dtype=jnp.float32)
    X2 = jax.random.normal(k5, (N2, D2), dtype=jnp.float32)
    eps2v = 0.2 + 0.3 * jax.random.uniform(k6, (N2,), dtype=jnp.float32)
    W2 = jax.random.normal(k7, (N2, K2), dtype=jnp.float32)
    ref2 = _multiquadric(eps2v[None, :] * _cdist(Xp2, X2)) @ W2

    out2 = jax.block_until_ready(rbf_forward(Xp2, X2, eps2v, W2, tm=128, tn=128))
    assert out2.shape == (M2, K2)
    err = jnp.max(jnp.abs(out2 - ref2))
    scale = jnp.maximum(jnp.max(jnp.abs(ref2)), 1.0)
    assert err <= 1e-2 * scale, (err, scale)   # bf16 phi/W feed, f32 accumulation

    # --- test 3: streaming (non-resident) W path, exact f32 ---
    out3 = jax.block_until_ready(
        rbf_forward(Xp2, X2, eps2v, W2, tm=128, tn=128,
                    use_bf16_mxu=False, w_resident_bytes=0))
    assert jnp.allclose(out3, ref2, atol=1e-3, rtol=1e-3)

    print("KERNEL_OK")
</pallas_src>

<mosaic_0001>
module attributes {stable_mosaic.version = 11 : i64} {
  func.func @_rbf_fwd_kernel(%arg0: i32, %arg1: i32, %arg2: memref<8x6xf32, #tpu.memory_space<vmem>>, %arg3: memref<128x6xf32, #tpu.memory_space<vmem>>, %arg4: memref<128x128xf32, #tpu.memory_space<vmem>>, %arg5: memref<8x128xf32, #tpu.memory_space<vmem>>) attributes {dimension_semantics = [#tpu.dimension_semantics<parallel>, #tpu.dimension_semantics<arbitrary>], iteration_bounds = array<i64: 2, 1>, scalar_prefetch = 0 : i64, scratch_operands = 0 : i64, tpu.core_type = #tpu.core_type<tc>, window_params = [{transform_indices = @transform_0, window_bounds = array<i64: 8, 6>}, {transform_indices = @transform_1, window_bounds = array<i64: 128, 6>}, {pipeline_mode = #tpu.pipeline_mode<synchronous>, transform_indices = @transform_2, window_bounds = array<i64: 128, 128>}, {transform_indices = @transform_3, window_bounds = array<i64: 8, 128>}]} {
    %c0_i32 = arith.constant 0 : i32
    %0 = arith.cmpi eq, %arg1, %c0_i32 : i32
    %1 = arith.extui %0 : i1 to i32
    %c0_i32_0 = arith.constant 0 : i32
    %2 = arith.cmpi ne, %1, %c0_i32_0 : i32
    scf.if %2 {
      %cst_11 = arith.constant 0.000000e+00 : f32
      %17 = vector.broadcast %cst_11 : f32 to vector<8x128xf32>
      %c0_12 = arith.constant 0 : index
      %c0_13 = arith.constant 0 : index
      %18 = vector.load %arg5[%c0_12, %c0_13] : memref<8x128xf32, #tpu.memory_space<vmem>>, vector<8x128xf32>
      tpu.vector_store %arg5[%c0_12, %c0_13], %17 {strides = array<i32>} : memref<8x128xf32, #tpu.memory_space<vmem>>, vector<8x128xf32>,
    } else {
    }
    %c0 = arith.constant 0 : index
    %c0_1 = arith.constant 0 : index
    %3 = vector.load %arg2[%c0, %c0_1] : memref<8x6xf32, #tpu.memory_space<vmem>>, vector<8x6xf32>
    %c0_2 = arith.constant 0 : index
    %c0_3 = arith.constant 0 : index
    %4 = vector.load %arg3[%c0_2, %c0_3] : memref<128x6xf32, #tpu.memory_space<vmem>>, vector<128x6xf32>
    %cst = arith.constant dense<0.000000e+00> : vector<8x128xf32>
    %5 = tpu.matmul %3, %4, %cst {dimension_numbers = #tpu.dot_dimension_numbers<[1], [1], [0], [0], [0, 0, 1, 0], [], []>} : vector<8x6xf32>, vector<128x6xf32>, vector<8x128xf32> -> vector<8x128xf32>
    %cst_4 = arith.constant 1.000000e+00 : f32
    %6 = vector.broadcast %cst_4 : f32 to vector<8x128xf32>
    %7 = arith.maximumf %5, %6 : vector<8x128xf32>
    %8 = math.sqrt %7 : vector<8x128xf32>
    %c128_i32 = arith.constant 128 : i32
    %9 = arith.muli %arg1, %c128_i32 : i32
    %10 = tpu.assume_multiple %9, 128 : i32
    %11 = arith.index_cast %10 : i32 to index
    %c0_5 = arith.constant 0 : index
    %12 = vector.load %arg4[%11, %c0_5] : memref<128x128xf32, #tpu.memory_space<vmem>>, vector<128x128xf32>
    %c0_6 = arith.constant 0 : index
    %c0_7 = arith.constant 0 : index
    %13 = vector.load %arg5[%c0_6, %c0_7] : memref<8x128xf32, #tpu.memory_space<vmem>>, vector<8x128xf32>
    %cst_8 = arith.constant dense<0.000000e+00> : vector<8x128xf32>
    %14 = tpu.matmul %8, %12, %cst_8 {dimension_numbers = #tpu.dot_dimension_numbers<[1], [0], [0], [1], [0, 0, 1, 1], [], []>} : vector<8x128xf32>, vector<128x128xf32>, vector<8x128xf32> -> vector<8x128xf32>
    %15 = arith.addf %13, %14 : vector<8x128xf32>
    %c0_9 = arith.constant 0 : index
    %c0_10 = arith.constant 0 : index
    %16 = vector.load %arg5[%c0_9, %c0_10] : memref<8x128xf32, #tpu.memory_space<vmem>>, vector<8x128xf32>
    tpu.vector_store %arg5[%c0_9, %c0_10], %15 {strides = array<i32>} : memref<8x128xf32, #tpu.memory_space<vmem>>, vector<8x128xf32>,
    return
  }
  func.func @transform_0(%arg0: i32, %arg1: i32) -> (i32, i32) {
    %c0_i32 = arith.constant 0 : i32
    %c0_i32_0 = arith.constant 0 : i32
    return %arg0, %c0_i32 : i32, i32
  }
  func.func @transform_1(%arg0: i32, %arg1: i32) -> (i32, i32) {
    %c0_i32 = arith.constant 0 : i32
    %c0_i32_0 = arith.constant 0 : i32
    return %arg1, %c0_i32 : i32, i32
  }
  func.func @transform_2(%arg0: i32, %arg1: i32) -> (i32, i32) {
    %c0_i32 = arith.constant 0 : i32
    %c0_i32_0 = arith.constant 0 : i32
    %c0_i32_1 = arith.constant 0 : i32
    return %c0_i32, %c0_i32_0 : i32, i32
  }
  func.func @transform_3(%arg0: i32, %arg1: i32) -> (i32, i32) {
    %c0_i32 = arith.constant 0 : i32
    %c0_i32_0 = arith.constant 0 : i32
    return %arg0, %c0_i32 : i32, i32
  }
}

</mosaic_0001>

<llo_original>
// kernel: tpu_custom_call.1
$region0: #{tpu_custom_call.1}
  #allocation0 [shape = 'u32[]', space=smem, size = 0x4, offset = 0x4, fixed_abs, tag = 'smem constant byte address 0x4 - core index']
  #allocation1 [shape = 'u32[144,128]{1,0:T(1,128)}', space=vmem, size = 0x12000, scoped, tag = 'internal scratch']
  %s0 = inlined_call_operand.vmem [shape: f32[16,6], index: 0, kind: input, shape index: {}]
  %s1 = inlined_call_operand.vmem [shape: f32[128,6], index: 1, kind: input, shape index: {}]
  %s2 = inlined_call_operand.vmem [shape: f32[128,128], index: 2, kind: input, shape index: {}]
  %s3 = inlined_call_operand.hbm [shape: f32[16,128], index: 3, kind: output, shape index: {}]
  %s4 = sld [smem:[#allocation0]]
  $region49: #{tpu_custom_call.1} parent=0
    _
  %s6 = ssub.s32 1, %s4
  %s7 = scalar_select 0, %s6, %s4
  $region1: #{tpu_custom_call.1} parent=0
    #allocation2 [shape = 'u8[8192]{0}', space=vmem, size = 0x2000, scoped, tag = 'output window, operand 0']
    #allocation3 [shape = 's32[2]{0}', space=sflag, size = 0x8, scoped, tag = 'scoped memory for tpu_custom_call.1']
    %8 = vsyncpa [#allocation3], 0
    %s9 = scalar_lea.sflag [#allocation3], 1
    %10 = vsyncpa %s9, 0
    loop: start=0, step=1, limit=4
    $region2: #{tpu_custom_call.1} parent=1 // loop_pre_header
      _
    $region3: #{tpu_custom_call.1} parent=1 // loop_header
      %s12 = sphi 0, %s16
      %p13 = scmp.ge.s32.totalorder %s12, 4
      %s19 = sphi 0, %s31
      %s20 = sphi 0, %s27
      %s21 = sphi 0, %s19
      %s22 = sphi 0, %s20
      %s23 = sphi 0, %s21
      %s24 = sphi 0, %s22
      %s34 = sphi 0, %s36
      %s37 = sphi 0, %s34
      %s38 = sphi 0, %s37
      %s54 = sphi 0, %s38
      %s60 = sphi 0, %s62
      %s63 = sphi 0, %s60
      %s64 = sphi 0, %s63
      %s80 = sphi 0, %s64
      %s84 = sphi 0, %s84
      %s86 = sphi 0, %s84
      %s87 = sphi 0, %s86
      %s101 = sphi 0, %s87
      %s107 = sphi 0, %s109
      %s110 = sphi 0, %s107
      %s111 = sphi 0, %s110
      %s127 = sphi 0, %s111
    $region4: #{tpu_custom_call.1} parent=1 // loop_header_branch
      %15 = sbr.rel (%p13) target = $region8
    $region5: #{tpu_custom_call.1} parent=1 // loop_body
      %s17 = ssub.s32 %s12, 1
      %s18 = ssub.s32 %s12, 2
      %s25 = sadd.s32 1, %s20
      %p26 = scmp.ge.s32.totalorder %s25, 1
      %s27 = scalar_select %p26, 0, %s25
      %s28 = sadd.s32 1, %s19
      %s29 = scalar_select %p26, %s28, %s19
      %p30 = scmp.ge.s32.totalorder %s29, 2
      %s31 = scalar_select %p30, 0, %s29
      %s32 = ssub.s32 %s19, %s31
      %p33 = scmp.eq.s32.totalorder %s32, 0
      %s35 = sadd.s32 %s34, 1
      %s36 = scalar_select %p33, %s34, %s35
      %p39 = pneg %p33
      %p40 = scmp.eq.s32.totalorder %s12, 1
      %p41 = por %p39, %p40
      %p42 = scmp.ne.s32.totalorder %s34, %s37
      %p43 = scmp.eq.s32.totalorder %s12, 0
      %p44 = por %p42, %p43
      %p45 = scmp.ne.s32.totalorder %s34, %s37
      %p46 = scmp.eq.s32.totalorder %s17, 1
      %p47 = por %p45, %p46
      %p48 = scmp.ne.s32.totalorder %s37, %s38
      %p49 = scmp.eq.s32.totalorder %s17, 0
      %p50 = por %p48, %p49
      %p51 = scmp.ne.s32.totalorder %s37, %s38
      %p52 = scmp.eq.s32.totalorder %s18, 1
      %p53 = por %p51, %p52
      %p55 = scmp.ne.s32.totalorder %s38, %s54
      %p56 = scmp.eq.s32.totalorder %s18, 0
      %p57 = por %p55, %p56
      %s58 = ssub.s32 %s20, %s27
      %p59 = scmp.eq.s32.totalorder %s58, 0
      %s61 = sadd.s32 %s60, 1
      %s62 = scalar_select %p59, %s60, %s61
      %p65 = pneg %p59
      %p66 = scmp.eq.s32.totalorder %s12, 1
      %p67 = por %p65, %p66
      %p68 = scmp.ne.s32.totalorder %s60, %s63
      %p69 = scmp.eq.s32.totalorder %s12, 0
      %p70 = por %p68, %p69
      %p71 = scmp.ne.s32.totalorder %s60, %s63
      %p72 = scmp.eq.s32.totalorder %s17, 1
      %p73 = por %p71, %p72
      %p74 = scmp.ne.s32.totalorder %s63, %s64
      %p75 = scmp.eq.s32.totalorder %s17, 0
      %p76 = por %p74, %p75
      %p77 = scmp.ne.s32.totalorder %s63, %s64
      %p78 = scmp.eq.s32.totalorder %s18, 1
      %p79 = por %p77, %p78
      %p81 = scmp.ne.s32.totalorder %s64, %s80
      %p82 = scmp.eq.s32.totalorder %s18, 0
      %p83 = por %p81, %p82
      %s85 = sadd.s32 %s84, 1
      %p88 = scmp.eq.s32.totalorder %s12, 1
      %p89 = scmp.ne.s32.totalorder %s84, %s86
      %p90 = scmp.eq.s32.totalorder %s12, 0
      %p91 = por %p89, %p90
      %p92 = scmp.ne.s32.totalorder %s84, %s86
      %p93 = scmp.eq.s32.totalorder %s17, 1
      %p94 = por %p92, %p93
      %p95 = scmp.ne.s32.totalorder %s86, %s87
      %p96 = scmp.eq.s32.totalorder %s17, 0
      %p97 = por %p95, %p96
      %p98 = scmp.ne.s32.totalorder %s86, %s87
      %p99 = scmp.eq.s32.totalorder %s18, 1
      %p100 = por %p98, %p99
      %p102 = scmp.ne.s32.totalorder %s87, %s101
      %p103 = scmp.eq.s32.totalorder %s18, 0
      %p104 = por %p102, %p103
      %s105 = ssub.s32 %s19, %s31
      %p106 = scmp.eq.s32.totalorder %s105, 0
      %s108 = sadd.s32 %s107, 1
      %s109 = scalar_select %p106, %s107, %s108
      %p112 = pneg %p106
      %p113 = scmp.eq.s32.totalorder %s12, 1
      %p114 = por %p112, %p113
      %p115 = scmp.ne.s32.totalorder %s107, %s110
      %p116 = scmp.eq.s32.totalorder %s12, 0
      %p117 = por %p115, %p116
      %p118 = scmp.ne.s32.totalorder %s107, %s110
      %p119 = scmp.eq.s32.totalorder %s17, 1
      %p120 = por %p118, %p119
      %p121 = scmp.ne.s32.totalorder %s110, %s111
      %p122 = scmp.eq.s32.totalorder %s17, 0
      %p123 = por %p121, %p122
      %p124 = scmp.ne.s32.totalorder %s110, %s111
      %p125 = scmp.eq.s32.totalorder %s18, 1
      %p126 = por %p124, %p125
      %p128 = scmp.ne.s32.totalorder %s111, %s127
      %p129 = scmp.eq.s32.totalorder %s18, 0
      %p130 = por %p128, %p129
      %p131 = scmp.le.s32.totalorder 1, %s12
      %p132 = scmp.lt.s32.totalorder %s12, 3
      %p133 = pnand %p131, %p132
      %p134 = pneg %p133
      // Predicated region
      $region9: #{tpu_custom_call.1} parent=5 // pred_check
        _
      $region10: #{tpu_custom_call.1} parent=5 // pred_check_branch
        %136 = sbr.rel (%p133) target = $region12
      $region11: #{tpu_custom_call.1} parent=5 // pred_region
        %s137 = ssub.s32 %s12, 1
        // Predicated region
        $region13: #{tpu_custom_call.1} parent=11 // pred_check
          %p138 = pneg %p76
        $region14: #{tpu_custom_call.1} parent=11 // pred_check_branch
          %140 = sbr.rel (%p138) target = $region16
        $region15: #{tpu_custom_call.1} parent=11 // pred_region
          %s141 = smul.u32 16, %s22
          %p142 = scmp.lt.s32.totalorder %s141, 15
          %s143 = scalar_select %p142, %s141, 15
          %s144 = smul.addr %s143, 8
          %s145 = scalar_lea.vmem %s1, %s144
          %s146 = smul.u32 16, %s22
        $region16: #{tpu_custom_call.1} parent=11 // pred_fallthru
          _
        // Predicated region
        $region17: #{tpu_custom_call.1} parent=11 // pred_check
          %p147 = pneg %p97
        $region18: #{tpu_custom_call.1} parent=11 // pred_check_branch
          %149 = sbr.rel (%p147) target = $region20
        $region19: #{tpu_custom_call.1} parent=11 // pred_region
          _
        $region20: #{tpu_custom_call.1} parent=11 // pred_fallthru
          _
      $region12: #{tpu_custom_call.1} parent=5 // pred_fallthru
        _
      %p150 = scmp.lt.s32.totalorder %s12, 2
      // Predicated region
      $region21: #{tpu_custom_call.1} parent=5 // pred_check
        %p151 = pneg %p150
      $region22: #{tpu_custom_call.1} parent=5 // pred_check_branch
        %153 = sbr.rel (%p151) target = $region24
      $region23: #{tpu_custom_call.1} parent=5 // pred_region
        // Predicated region
        $region25: #{tpu_custom_call.1} parent=23 // pred_check
          %p154 = pneg %p44
        $region26: #{tpu_custom_call.1} parent=23 // pred_check_branch
          %156 = sbr.rel (%p154) target = $region28
        $region27: #{tpu_custom_call.1} parent=23 // pred_region
          %p157 = scmp.lt.s32.totalorder %s19, 1
          %s158 = scalar_select %p157, %s19, 1
          %s159 = smul.addr %s158, 8
          %s160 = scalar_lea.vmem %s0, %s159
        $region28: #{tpu_custom_call.1} parent=23 // pred_fallthru
          _
      $region24: #{tpu_custom_call.1} parent=5 // pred_fallthru
        _
      %p161 = scmp.le.s32.totalorder 1, %s12
      %p162 = scmp.lt.s32.totalorder %s12, 3
      %p163 = pnand %p161, %p162
      %p164 = pneg %p163
      // Predicated region
      $region29: #{tpu_custom_call.1} parent=5 // pred_check
        _
      $region30: #{tpu_custom_call.1} parent=5 // pred_check_branch
        %166 = sbr.rel (%p163) target = $region32
      $region31: #{tpu_custom_call.1} parent=5 // pred_region
        %s167 = ssub.s32 %s12, 1
        %p168 = scmp.lt.s32.totalorder %s21, 1
        %s169 = scalar_select %p168, %s21, 1
        %s170 = smul.addr %s169, 8
        %s171 = scalar_lea.vmem %s0, %s170
        %p172 = pneg %p50
        %p173 = pneg %p47
        %s174 = smul.u32 16, %s22
        %p175 = scmp.lt.s32.totalorder %s174, 15
        %s176 = scalar_select %p175, %s174, 15
        %s177 = smul.addr %s176, 8
        %s178 = scalar_lea.vmem %s1, %s177
        %p179 = pneg %p76
        %p180 = pneg %p73
        %p181 = pneg %p97
        %p182 = pneg %p94
        %p183 = pneg %p123
        %p184 = pneg %p120
        %s185 = sand.u32 %s110, 1
        %s186 = scalar_lea.sflag [#allocation3], %s185
        %s187 = sand.u32 %s110, 1
        %s188 = smul.addr %s187, 8
        %s189 = scalar_lea.vmem [#allocation2], %s188
        %p190 = scmp.lt.s32.totalorder %s21, 1
        %s191 = scalar_select %p190, %s21, 1
        %s192 = smul.addr %s191, 8
        %s193 = scalar_lea.vmem %s0, %s192
        %s194 = smul.u32 16, %s22
        %p195 = scmp.lt.s32.totalorder %s194, 15
        %s196 = scalar_select %p195, %s194, 15
        %s197 = smul.addr %s196, 8
        %s198 = scalar_lea.vmem %s1, %s197
        %s199 = smul.u32 16, %s22
        %p200 = scmp.eq.s32.totalorder %s22, 0
        // Predicated region
        $region33: #{tpu_custom_call.1} parent=31 // pred_check
          %p201 = pneg %p200
        $region34: #{tpu_custom_call.1} parent=31 // pred_check_branch
          %203 = sbr.rel (%p201) target = $region36
        $region35: #{tpu_custom_call.1} parent=31 // pred_region
          %204 = vst [vmem:[%s189] sm:$0xff] 0.0
        $region36: #{tpu_custom_call.1} parent=31 // pred_fallthru
          _
        %v205 = vld [vmem:[%s193] sm:$0xff]
        %v206 = vld [vmem:[%s198] sm:$0xff]
        %v207 = vld [vmem:[%s198 + $0x8] sm:$0xff]
        %v208 = vld [vmem:[%s198 + $0x10] sm:$0xff]
        %v209 = vld [vmem:[%s198 + $0x18] sm:$0xff]
        %v210 = vld [vmem:[%s198 + $0x20] sm:$0xff]
        %v211 = vld [vmem:[%s198 + $0x28] sm:$0xff]
        %v212 = vld [vmem:[%s198 + $0x30] sm:$0xff]
        %v213 = vld [vmem:[%s198 + $0x38] sm:$0xff]
        %v214 = vld [vmem:[%s198 + $0x40] sm:$0xff]
        %v215 = vld [vmem:[%s198 + $0x48] sm:$0xff]
        %v216 = vld [vmem:[%s198 + $0x50] sm:$0xff]
        %v217 = vld [vmem:[%s198 + $0x58] sm:$0xff]
        %v218 = vld [vmem:[%s198 + $0x60] sm:$0xff]
        %v219 = vld [vmem:[%s198 + $0x68] sm:$0xff]
        %v220 = vld [vmem:[%s198 + $0x70] sm:$0xff]
        %v221 = vld [vmem:[%s198 + $0x78] sm:$0xff]
        %vm222 = vcmask 48128
        %v224 = vsel %vm222, %v205, 0
        %v227 = vsel %vm222, %v206, 0
        %v230 = vsel %vm222, %v207, 0
        %v233 = vsel %vm222, %v208, 0
        %v236 = vsel %vm222, %v209, 0
        %v239 = vsel %vm222, %v210, 0
        %v242 = vsel %vm222, %v211, 0
        %v245 = vsel %vm222, %v212, 0
        %v248 = vsel %vm222, %v213, 0
        %v251 = vsel %vm222, %v214, 0
        %v254 = vsel %vm222, %v215, 0
        %v257 = vsel %vm222, %v216, 0
        %v260 = vsel %vm222, %v217, 0
        %v263 = vsel %vm222, %v218, 0
        %v266 = vsel %vm222, %v219, 0
        %v269 = vsel %vm222, %v220, 0
        %v272 = vsel %vm222, %v221, 0
        %274 = vmatprep.subr.mxu0 0.0
        %275 = vmatpush1.xpose.msra.mxu0 %v227
        %276 = vmatprep.subr.mxu0 0.0
        %277 = vmatpush1.xpose.msra.mxu0 %v230
        %278 = vmatprep.subr.mxu0 0.0
        %279 = vmatpush1.xpose.msra.mxu0 %v233
        %280 = vmatprep.subr.mxu0 0.0
        %281 = vmatpush1.xpose.msra.mxu0 %v236
        %282 = vmatprep.subr.mxu0 0.0
        %283 = vmatpush1.xpose.msra.mxu0 %v239
        %284 = vmatprep.subr.mxu0 0.0
        %285 = vmatpush1.xpose.msra.mxu0 %v242
        %286 = vmatprep.subr.mxu0 0.0
        %287 = vmatpush1.xpose.msra.mxu0 %v245
        %288 = vmatprep.subr.mxu0 0.0
        %289 = vmatpush1.xpose.msra.mxu0 %v248
        %290 = vmatprep.subr.mxu0 0.0
        %291 = vmatpush1.xpose.msra.mxu0 %v251
        %292 = vmatprep.subr.mxu0 0.0
        %293 = vmatpush1.xpose.msra.mxu0 %v254
        %294 = vmatprep.subr.mxu0 0.0
        %295 = vmatpush1.xpose.msra.mxu0 %v257
        %296 = vmatprep.subr.mxu0 0.0
        %297 = vmatpush1.xpose.msra.mxu0 %v260
        %298 = vmatprep.subr.mxu0 0.0
        %299 = vmatpush1.xpose.msra.mxu0 %v263
        %300 = vmatprep.subr.mxu0 0.0
        %301 = vmatpush1.xpose.msra.mxu0 %v266
        %302 = vmatprep.subr.mxu0 0.0
        %303 = vmatpush1.xpose.msra.mxu0 %v269
        %304 = vmatprep.subr.mxu0 0.0
        %305 = vmatpush1.xpose.msra.mxu0 %v272
        %306 = vmatprep.subr.mxu0 0.0
        %307 = vmatpush1.xpose.msra.mxu0 0.0
        %308 = vmatprep.subr.mxu0 0.0
        %309 = vmatpush1.xpose.msra.mxu0 0.0
        %310 = vmatprep.subr.mxu0 0.0
        %311 = vmatpush1.xpose.msra.mxu0 0.0
        %312 = vmatprep.subr.mxu0 0.0
        %313 = vmatpush1.xpose.msra.mxu0 0.0
        %314 = vmatprep.subr.mxu0 0.0
        %315 = vmatpush1.xpose.msra.mxu0 0.0
        %316 = vmatprep.subr.mxu0 0.0
        %317 = vmatpush1.xpose.msra.mxu0 0.0
        %318 = vmatprep.subr.mxu0 0.0
        %319 = vmatpush1.xpose.msra.mxu0 0.0
        %320 = vmatprep.subr.mxu0 0.0
        %321 = vmatpush1.xpose.msra.mxu0 0.0
        %322 = vmatprep.subr.mxu0 0.0
        %323 = vmatpush1.xpose.msra.mxu0 0.0
        %324 = vmatprep.subr.mxu0 0.0
        %325 = vmatpush1.xpose.msra.mxu0 0.0
        %326 = vmatprep.subr.mxu0 0.0
        %327 = vmatpush1.xpose.msra.mxu0 0.0
        %328 = vmatprep.subr.mxu0 0.0
        %329 = vmatpush1.xpose.msra.mxu0 0.0
        %330 = vmatprep.subr.mxu0 0.0
        %331 = vmatpush1.xpose.msra.mxu0 0.0
        %332 = vmatprep.subr.mxu0 0.0
        %333 = vmatpush1.xpose.msra.mxu0 0.0
        %334 = vmatprep.subr.mxu0 0.0
        %335 = vmatpush1.xpose.msra.mxu0 0.0
        %336 = vmatprep.subr.mxu0 0.0
        %337 = vmatpush1.xpose.msra.mxu0 0.0
        %338 = vmatprep.mubr.f32.mxu0 0.0
        %339 = vmatmul.mubr.f32.gmra.mrb[0].mxu0 %v224
        %v340 = vpop.f32.mrb[0].mxu0
        %v341 = vadd.f32 0.0, %v340
        %v342 = vpop.f32.mrb[0].mxu0
        %343 = vdwg.mxu0
        %v344 = vmax.f32 %v341, 1.0
        %v345 = vrsqrt.pop %v344
        %v346 = vmul.f32 %v344, %v345
        %vm347 = vcmp.eq.f32.partialorder %v344, inf
        %v348 = vsel %vm347, %v344, %v346
        %vm349 = vcmp.eq.f32.partialorder %v344, 0.0
        %v350 = vand.u32 %v344, 2147483648
        %v351 = vsel %vm349, %v350, %v348
        %s352 = smul.u32 %s22, 128
        %s353 = scalar_lea.vmem %s2, %s352
        %v354 = vld [vmem:[%s353] sm:$0xff]
        %v355 = vld [vmem:[%s353 + $0x8] sm:$0xff]
        %v356 = vld [vmem:[%s353 + $0x10] sm:$0xff]
        %v357 = vld [vmem:[%s353 + $0x18] sm:$0xff]
        %v358 = vld [vmem:[%s353 + $0x20] sm:$0xff]
        %v359 = vld [vmem:[%s353 + $0x28] sm:$0xff]
        %v360 = vld [vmem:[%s353 + $0x30] sm:$0xff]
        %v361 = vld [vmem:[%s353 + $0x38] sm:$0xff]
        %v362 = vld [vmem:[%s353 + $0x40] sm:$0xff]
        %v363 = vld [vmem:[%s353 + $0x48] sm:$0xff]
        %v364 = vld [vmem:[%s353 + $0x50] sm:$0xff]
        %v365 = vld [vmem:[%s353 + $0x58] sm:$0xff]
        %v366 = vld [vmem:[%s353 + $0x60] sm:$0xff]
        %v367 = vld [vmem:[%s353 + $0x68] sm:$0xff]
        %v368 = vld [vmem:[%s353 + $0x70] sm:$0xff]
        %v369 = vld [vmem:[%s353 + $0x78] sm:$0xff]
        %v370 = vld [vmem:[%s189] sm:$0xff]
        %371 = vmatprep.subr.mxu0 0.0
        %372 = vmatpush1.msra.mxu0 %v354
        %373 = vmatprep.subr.mxu0 0.0
        %374 = vmatpush1.msra.mxu0 %v355
        %375 = vmatprep.subr.mxu0 0.0
        %376 = vmatpush1.msra.mxu0 %v356
        %377 = vmatprep.subr.mxu0 0.0
        %378 = vmatpush1.msra.mxu0 %v357
        %379 = vmatprep.subr.mxu0 0.0
        %380 = vmatpush1.msra.mxu0 %v358
        %381 = vmatprep.subr.mxu0 0.0
        %382 = vmatpush1.msra.mxu0 %v359
        %383 = vmatprep.subr.mxu0 0.0
        %384 = vmatpush1.msra.mxu0 %v360
        %385 = vmatprep.subr.mxu0 0.0
        %386 = vmatpush1.msra.mxu0 %v361
        %387 = vmatprep.subr.mxu0 0.0
        %388 = vmatpush1.msra.mxu0 %v362
        %389 = vmatprep.subr.mxu0 0.0
        %390 = vmatpush1.msra.mxu0 %v363
        %391 = vmatprep.subr.mxu0 0.0
        %392 = vmatpush1.msra.mxu0 %v364
        %393 = vmatprep.subr.mxu0 0.0
        %394 = vmatpush1.msra.mxu0 %v365
        %395 = vmatprep.subr.mxu0 0.0
        %396 = vmatpush1.msra.mxu0 %v366
        %397 = vmatprep.subr.mxu0 0.0
        %398 = vmatpush1.msra.mxu0 %v367
        %399 = vmatprep.subr.mxu0 0.0
        %400 = vmatpush1.msra.mxu0 %v368
        %401 = vmatprep.subr.mxu0 0.0
        %402 = vmatpush1.msra.mxu0 %v369
        %403 = vmatprep.subr.mxu0 0.0
        %404 = vmatpush1.msra.mxu0 0.0
        %405 = vmatprep.subr.mxu0 0.0
        %406 = vmatpush1.msra.mxu0 0.0
        %407 = vmatprep.subr.mxu0 0.0
        %408 = vmatpush1.msra.mxu0 0.0
        %409 = vmatprep.subr.mxu0 0.0
        %410 = vmatpush1.msra.mxu0 0.0
        %411 = vmatprep.subr.mxu0 0.0
        %412 = vmatpush1.msra.mxu0 0.0
        %413 = vmatprep.subr.mxu0 0.0
        %414 = vmatpush1.msra.mxu0 0.0
        %415 = vmatprep.subr.mxu0 0.0
        %416 = vmatpush1.msra.mxu0 0.0
        %417 = vmatprep.subr.mxu0 0.0
        %418 = vmatpush1.msra.mxu0 0.0
        %419 = vmatprep.subr.mxu0 0.0
        %420 = vmatpush1.msra.mxu0 0.0
        %421 = vmatprep.subr.mxu0 0.0
        %422 = vmatpush1.msra.mxu0 0.0
        %423 = vmatprep.subr.mxu0 0.0
        %424 = vmatpush1.msra.mxu0 0.0
        %425 = vmatprep.subr.mxu0 0.0
        %426 = vmatpush1.msra.mxu0 0.0
        %427 = vmatprep.subr.mxu0 0.0
        %428 = vmatpush1.msra.mxu0 0.0
        %429 = vmatprep.subr.mxu0 0.0
        %430 = vmatpush1.msra.mxu0 0.0
        %431 = vmatprep.subr.mxu0 0.0
        %432 = vmatpush1.msra.mxu0 0.0
        %433 = vmatprep.subr.mxu0 0.0
        %434 = vmatpush1.msra.mxu0 0.0
        %435 = vmatprep.mubr.f32.mxu0 0.0
        %436 = vmatmul.mubr.f32.gmra.mrb[0].mxu0 %v351
        %v437 = vpop.f32.mrb[0].mxu0
        %v438 = vadd.f32 0.0, %v437
        %v439 = vpop.f32.mrb[0].mxu0
        %440 = vdwg.mxu0
        %v441 = vadd.f32 %v370, %v438
        %442 = vst [vmem:[%s189] sm:$0xff] %v441
        %s443 = sand.u32 %s110, 1
        %s444 = scalar_lea.sflag [#allocation3], %s443
        %s445 = sand.u32 %s110, 1
        %s446 = smul.addr %s445, 8
        %s447 = scalar_lea.vmem [#allocation2], %s446
        // Predicated region
        $region37: #{tpu_custom_call.1} parent=31 // pred_check
          %p448 = pneg %p120
        $region38: #{tpu_custom_call.1} parent=31 // pred_check_branch
          %450 = sbr.rel (%p448) target = $region40
        $region39: #{tpu_custom_call.1} parent=31 // pred_region
          %s452 = ssub.s32 128, 128
          %453 = vsyncadd %s444, %s452
          %s454 = smul.addr %s21, 128
          %s455 = scalar_lea.hbm %s3, %s454
          %s457 = sshll.u32 %s447, 4
          %s458 = int_to_ptr.vmem [resolvable:$true] %s457
          %460 = dma.vmem_to_hbm [thread:$0]  %s458, 128, %s455, %s444
        $region40: #{tpu_custom_call.1} parent=31 // pred_fallthru
          _
      $region32: #{tpu_custom_call.1} parent=5 // pred_fallthru
        _
      %p461 = scmp.le.s32.totalorder 2, %s12
      // Predicated region
      $region41: #{tpu_custom_call.1} parent=5 // pred_check
        %p462 = pneg %p461
      $region42: #{tpu_custom_call.1} parent=5 // pred_check_branch
        %464 = sbr.rel (%p462) target = $region44
      $region43: #{tpu_custom_call.1} parent=5 // pred_region
        %s465 = ssub.s32 %s12, 2
        // Predicated region
        $region45: #{tpu_custom_call.1} parent=43 // pred_check
          %p466 = pneg %p126
        $region46: #{tpu_custom_call.1} parent=43 // pred_check_branch
          %468 = sbr.rel (%p466) target = $region48
        $region47: #{tpu_custom_call.1} parent=43 // pred_region
          %s469 = sand.u32 %s111, 1
          %s470 = scalar_lea.sflag [#allocation3], %s469
          %s471 = sand.u32 %s111, 1
          %s472 = smul.addr %s471, 8
          %s473 = scalar_lea.vmem [#allocation2], %s472
          %474 = dma.done %s470, 128
        $region48: #{tpu_custom_call.1} parent=43 // pred_fallthru
          _
      $region44: #{tpu_custom_call.1} parent=5 // pred_fallthru
        _
    $region6: #{tpu_custom_call.1} parent=1 // loop_footer
      %s16 = sadd.s32 1, %s12
    $region7: #{tpu_custom_call.1} parent=1 // loop_footer_branch
      %11 = sbr.rel target = $region3
    $region8: #{tpu_custom_call.1} parent=1 // loop_exit
      _
    %475 = vsyncpa [#allocation3], 1
    %s476 = scalar_lea.sflag [#allocation3], 1
    %477 = vsyncpa %s476, 1

</llo_original>
